<compile_context>
chip_gen: v7x
topology: tpu7x:2x2x1
jax: 0.10.0
libtpu: 0.0.40
codegen_flags: <defaults>
</compile_context>

<pallas_src>
import functools

import jax
import jax.numpy as jnp
import numpy as np
from jax.experimental import pallas as pl
from jax.experimental.pallas import tpu as pltpu


# --------------------------------------------------------------------------
# Host-side index math (PyTorch 'nearest' semantics).
# --------------------------------------------------------------------------
def _nearest_src_indices(out_size, in_size, scale):
    """PyTorch 'nearest' source index: floor(dst * (1/scale)) in float32, clamped."""
    inv = np.float32(1.0) / np.float32(scale)
    dst = np.arange(out_size, dtype=np.float32)
    src = np.floor(dst * inv).astype(np.int64)
    return np.clip(src, 0, in_size - 1)


def _rows_to_runs(src_idx):
    """Group consecutive equal source rows into (out_start, length, src_row) runs."""
    runs = []
    n = len(src_idx)
    start = 0
    for j in range(1, n + 1):
        if j == n or src_idx[j] != src_idx[start]:
            runs.append((start, j - start, int(src_idx[start])))
            start = j
    return tuple(runs)


# --------------------------------------------------------------------------
# VMEM-aware batch tiling.
# --------------------------------------------------------------------------
def _vmem_capacity_bytes():
    try:
        info = pltpu.get_tpu_info()
        cap = getattr(info, "vmem_capacity_bytes", None)
        if cap:
            return int(cap)
    except Exception:
        pass
    return 128 << 20  # conservative default (v5e/v6e size)


def _plan_tiling(nc, per_image_bytes, budget_bytes):
    """Pick (b_tile, grid_steps, nc_padded).

    Constraints: b_tile * per_image <= budget; >= 4 grid steps when possible
    (pipeline + megacore); even step count when > 1 step (v7x 2-TC balance).
    NC is padded rather than falling back to b_tile = 1 for awkward NC.
    """
    cap = max(1, int(budget_bytes) // max(int(per_image_bytes), 1))
    cap = min(cap, nc)
    steps = pl.cdiv(nc, cap)
    steps = max(steps, min(4, nc))          # target >= 4 steps (or nc if smaller)
    if steps > 1 and steps % 2 == 1:
        steps += 1                          # even steps for v7x megacore balance
    b_tile = max(1, pl.cdiv(nc, steps))
    steps = pl.cdiv(nc, b_tile)
    if steps > 1 and steps % 2 == 1:
        steps += 1
    nc_pad = b_tile * steps
    return b_tile, steps, nc_pad


# --------------------------------------------------------------------------
# Kernel.
# --------------------------------------------------------------------------
def _resample_kernel(x_ref, swt_ref, o_ref, *, b_tile, h_in, w_in, w_out,
                     h_runs, w_identity):
    # x_ref  : (B_TILE, H_in, W_in)
    # swt_ref: (W_in, W_out)  exact 0/1 column-selection matrix (transposed)
    # o_ref  : (B_TILE, H_out, W_out)
    x = x_ref[...]

    # --- W (lane) expansion: one tall MXU matmul, batch and H fused into M.
    if w_identity:
        y = x
    else:
        y = jnp.dot(x.reshape(b_tile * h_in, w_in), swt_ref[...],
                    preferred_element_type=o_ref.dtype)
        y = y.reshape(b_tile, h_in, w_out)

    # --- H (sublane) expansion: build the full output block in-value
    # (concatenation of sublane-broadcast runs), then ONE dense store.
    if h_runs is None:
        block = y
    else:
        pieces = []
        for _, length, src in h_runs:
            row = y[:, src:src + 1, :]                      # (B_TILE, 1, W_out)
            if length > 1:
                row = jnp.broadcast_to(row, (b_tile, length, w_out))
            pieces.append(row)
        block = pieces[0] if len(pieces) == 1 else jnp.concatenate(pieces, axis=1)

    o_ref[...] = block


# --------------------------------------------------------------------------
# Wrapper.
# --------------------------------------------------------------------------
def speed_change_nearest(x: jax.Array, speed_multiplier: float) -> jax.Array:
    """x: (N, C, H, W) -> (N, C, floor(H*s), floor(W*s)), nearest-neighbor."""
    N, C, H_in, W_in = x.shape
    H_out = int(np.floor(H_in * float(speed_multiplier)))
    W_out = int(np.floor(W_in * float(speed_multiplier)))
    if H_out <= 0 or W_out <= 0:
        raise ValueError("scale factor too small for this input size")

    h_src = _nearest_src_indices(H_out, H_in, speed_multiplier)
    w_src = _nearest_src_indices(W_out, W_in, speed_multiplier)

    # Non f32/bf16 dtypes: exact-copy semantics via plain-JAX gather.
    # TODO(synk): add an in-kernel copy/gather path for ints (no MXU on ints).
    if x.dtype not in (jnp.float32, jnp.bfloat16):
        return x[:, :, h_src, :][:, :, :, w_src]

    h_identity = bool(np.array_equal(h_src, np.arange(H_out)))
    w_identity = bool(np.array_equal(w_src, np.arange(W_out)) and W_out == W_in)
    h_runs = None if h_identity else _rows_to_runs(h_src)

    # 0/1 selection matrix (transposed). Exact in bf16 and f32; matches x's
    # dtype so bf16 inputs use the MXU natively with no f32 intermediate.
    S_wT = np.zeros((W_in, W_out), dtype=np.float32)
    S_wT[w_src, np.arange(W_out)] = 1.0
    S_wT = jnp.asarray(S_wT, dtype=x.dtype)

    NC = N * C
    itemsize = x.dtype.itemsize
    # Per-image VMEM footprint of one pipeline stage:
    #   double-buffered input tile + double-buffered output tile + matmul
    #   intermediate y (B_TILE, H_in, W_out) in the compute dtype.
    per_image = itemsize * (2 * H_in * W_in + 2 * H_out * W_out + H_in * W_out)
    swt_bytes = int(S_wT.size) * itemsize

    vmem_cap = _vmem_capacity_bytes()
    budget = min(24 << 20, vmem_cap // 4)          # gen-aware (v7x: 64MiB -> 16MiB)
    budget = max(1 << 20, budget - 2 * swt_bytes)  # leave room for the (shared) S_wT

    b_tile, steps, NC_pad = _plan_tiling(NC, per_image, budget)

    x_flat = x.reshape(NC, H_in, W_in)
    if NC_pad > NC:
        x_flat = jnp.pad(x_flat, ((0, NC_pad - NC), (0, 0), (0, 0)))

    total_vmem = b_tile * per_image + 2 * swt_bytes
    vmem_limit = int(min(vmem_cap * 3 // 4, max(2 * total_vmem, 32 << 20)))

    kernel = functools.partial(
        _resample_kernel, b_tile=b_tile, h_in=H_in, w_in=W_in, w_out=W_out,
        h_runs=h_runs, w_identity=w_identity)

    cost = pl.CostEstimate(
        flops=0 if w_identity else 2 * NC_pad * H_in * W_in * W_out,
        transcendentals=0,
        bytes_accessed=int(NC_pad * H_in * W_in * itemsize
                           + NC_pad * H_out * W_out * itemsize
                           + swt_bytes))

    out_flat = pl.pallas_call(
        kernel,
        out_shape=jax.ShapeDtypeStruct((NC_pad, H_out, W_out), x.dtype),
        grid_spec=pltpu.PrefetchScalarGridSpec(
            num_scalar_prefetch=0,
            grid=(steps,),
            in_specs=[
                pl.BlockSpec((b_tile, H_in, W_in), lambda i: (i, 0, 0)),  # x batch
                pl.BlockSpec((W_in, W_out), lambda i: (0, 0)),            # S_wT (shared)
            ],
            out_specs=pl.BlockSpec((b_tile, H_out, W_out), lambda i: (i, 0, 0)),
        ),
        compiler_params=pltpu.CompilerParams(
            dimension_semantics=("parallel",),
            vmem_limit_bytes=vmem_limit),
        cost_estimate=cost,
    )(x_flat, S_wT)

    if NC_pad > NC:
        out_flat = out_flat[:NC]
    return out_flat.reshape(N, C, H_out, W_out)


# --------------------------------------------------------------------------
# Pure-JAX reference (matches PyTorch F.interpolate(mode='nearest')).
# --------------------------------------------------------------------------
def _reference_nearest(x: jax.Array, speed_multiplier: float) -> jax.Array:
    N, C, H_in, W_in = x.shape
    H_out = int(np.floor(H_in * float(speed_multiplier)))
    W_out = int(np.floor(W_in * float(speed_multiplier)))
    h_src = _nearest_src_indices(H_out, H_in, speed_multiplier)
    w_src = _nearest_src_indices(W_out, W_in, speed_multiplier)
    return x[:, :, h_src, :][:, :, :, w_src]


if __name__ == "__main__":
    speed_multiplier = 2.0
    key = jax.random.PRNGKey(0)
    x = jax.random.normal(key, (2, 4, 16, 16), dtype=jnp.float32)

    out = speed_change_nearest(x, speed_multiplier)
    out = jax.block_until_ready(out)

    ref = _reference_nearest(x, speed_multiplier)
    assert out.shape == (2, 4, 32, 32), out.shape
    assert jnp.allclose(out, ref), "mismatch vs nearest-interp reference"

    print("KERNEL_OK")
</pallas_src>

<mosaic_0001>
module attributes {stable_mosaic.version = 11 : i64} {
  func.func @_resample_kernel(%arg0: i32, %arg1: memref<2x16x16xf32, #tpu.memory_space<vmem>>, %arg2: memref<16x32xf32, #tpu.memory_space<vmem>>, %arg3: memref<2x32x32xf32, #tpu.memory_space<vmem>>) attributes {dimension_semantics = [#tpu.dimension_semantics<parallel>], iteration_bounds = array<i64: 4>, scalar_prefetch = 0 : i64, scratch_operands = 0 : i64, tpu.core_type = #tpu.core_type<tc>, window_params = [{transform_indices = @transform_0, window_bounds = array<i64: 2, 16, 16>}, {pipeline_mode = #tpu.pipeline_mode<synchronous>, transform_indices = @transform_1, window_bounds = array<i64: 16, 32>}, {transform_indices = @transform_2, window_bounds = array<i64: 2, 32, 32>}]} {
    %c0 = arith.constant 0 : index
    %c0_0 = arith.constant 0 : index
    %c0_1 = arith.constant 0 : index
    %0 = vector.load %arg1[%c0, %c0_0, %c0_1] : memref<2x16x16xf32, #tpu.memory_space<vmem>>, vector<2x16x16xf32>
    %1 = vector.shape_cast %0 : vector<2x16x16xf32> to vector<32x16xf32>
    %c0_2 = arith.constant 0 : index
    %c0_3 = arith.constant 0 : index
    %2 = vector.load %arg2[%c0_2, %c0_3] : memref<16x32xf32, #tpu.memory_space<vmem>>, vector<16x32xf32>
    %cst = arith.constant dense<0.000000e+00> : vector<32x32xf32>
    %3 = tpu.matmul %1, %2, %cst {dimension_numbers = #tpu.dot_dimension_numbers<[1], [0], [0], [1], [0, 0, 1, 1], [], []>} : vector<32x16xf32>, vector<16x32xf32>, vector<32x32xf32> -> vector<32x32xf32>
    %4 = vector.shape_cast %3 : vector<32x32xf32> to vector<2x16x32xf32>
    %5 = vector.extract_strided_slice %4 {offsets = [0, 0, 0], sizes = [2, 1, 32], strides = [1, 1, 1]} : vector<2x16x32xf32> to vector<2x1x32xf32>
    %6 = vector.shape_cast %5 : vector<2x1x32xf32> to vector<2x1x32xf32>
    %7 = vector.broadcast %6 : vector<2x1x32xf32> to vector<2x2x32xf32>
    %8 = vector.extract_strided_slice %4 {offsets = [0, 1, 0], sizes = [2, 1, 32], strides = [1, 1, 1]} : vector<2x16x32xf32> to vector<2x1x32xf32>
    %9 = vector.shape_cast %8 : vector<2x1x32xf32> to vector<2x1x32xf32>
    %10 = vector.broadcast %9 : vector<2x1x32xf32> to vector<2x2x32xf32>
    %11 = vector.extract_strided_slice %4 {offsets = [0, 2, 0], sizes = [2, 1, 32], strides = [1, 1, 1]} : vector<2x16x32xf32> to vector<2x1x32xf32>
    %12 = vector.shape_cast %11 : vector<2x1x32xf32> to vector<2x1x32xf32>
    %13 = vector.broadcast %12 : vector<2x1x32xf32> to vector<2x2x32xf32>
    %14 = vector.extract_strided_slice %4 {offsets = [0, 3, 0], sizes = [2, 1, 32], strides = [1, 1, 1]} : vector<2x16x32xf32> to vector<2x1x32xf32>
    %15 = vector.shape_cast %14 : vector<2x1x32xf32> to vector<2x1x32xf32>
    %16 = vector.broadcast %15 : vector<2x1x32xf32> to vector<2x2x32xf32>
    %17 = vector.extract_strided_slice %4 {offsets = [0, 4, 0], sizes = [2, 1, 32], strides = [1, 1, 1]} : vector<2x16x32xf32> to vector<2x1x32xf32>
    %18 = vector.shape_cast %17 : vector<2x1x32xf32> to vector<2x1x32xf32>
    %19 = vector.broadcast %18 : vector<2x1x32xf32> to vector<2x2x32xf32>
    %20 = vector.extract_strided_slice %4 {offsets = [0, 5, 0], sizes = [2, 1, 32], strides = [1, 1, 1]} : vector<2x16x32xf32> to vector<2x1x32xf32>
    %21 = vector.shape_cast %20 : vector<2x1x32xf32> to vector<2x1x32xf32>
    %22 = vector.broadcast %21 : vector<2x1x32xf32> to vector<2x2x32xf32>
    %23 = vector.extract_strided_slice %4 {offsets = [0, 6, 0], sizes = [2, 1, 32], strides = [1, 1, 1]} : vector<2x16x32xf32> to vector<2x1x32xf32>
    %24 = vector.shape_cast %23 : vector<2x1x32xf32> to vector<2x1x32xf32>
    %25 = vector.broadcast %24 : vector<2x1x32xf32> to vector<2x2x32xf32>
    %26 = vector.extract_strided_slice %4 {offsets = [0, 7, 0], sizes = [2, 1, 32], strides = [1, 1, 1]} : vector<2x16x32xf32> to vector<2x1x32xf32>
    %27 = vector.shape_cast %26 : vector<2x1x32xf32> to vector<2x1x32xf32>
    %28 = vector.broadcast %27 : vector<2x1x32xf32> to vector<2x2x32xf32>
    %29 = vector.extract_strided_slice %4 {offsets = [0, 8, 0], sizes = [2, 1, 32], strides = [1, 1, 1]} : vector<2x16x32xf32> to vector<2x1x32xf32>
    %30 = vector.shape_cast %29 : vector<2x1x32xf32> to vector<2x1x32xf32>
    %31 = vector.broadcast %30 : vector<2x1x32xf32> to vector<2x2x32xf32>
    %32 = vector.extract_strided_slice %4 {offsets = [0, 9, 0], sizes = [2, 1, 32], strides = [1, 1, 1]} : vector<2x16x32xf32> to vector<2x1x32xf32>
    %33 = vector.shape_cast %32 : vector<2x1x32xf32> to vector<2x1x32xf32>
    %34 = vector.broadcast %33 : vector<2x1x32xf32> to vector<2x2x32xf32>
    %35 = vector.extract_strided_slice %4 {offsets = [0, 10, 0], sizes = [2, 1, 32], strides = [1, 1, 1]} : vector<2x16x32xf32> to vector<2x1x32xf32>
    %36 = vector.shape_cast %35 : vector<2x1x32xf32> to vector<2x1x32xf32>
    %37 = vector.broadcast %36 : vector<2x1x32xf32> to vector<2x2x32xf32>
    %38 = vector.extract_strided_slice %4 {offsets = [0, 11, 0], sizes = [2, 1, 32], strides = [1, 1, 1]} : vector<2x16x32xf32> to vector<2x1x32xf32>
    %39 = vector.shape_cast %38 : vector<2x1x32xf32> to vector<2x1x32xf32>
    %40 = vector.broadcast %39 : vector<2x1x32xf32> to vector<2x2x32xf32>
    %41 = vector.extract_strided_slice %4 {offsets = [0, 12, 0], sizes = [2, 1, 32], strides = [1, 1, 1]} : vector<2x16x32xf32> to vector<2x1x32xf32>
    %42 = vector.shape_cast %41 : vector<2x1x32xf32> to vector<2x1x32xf32>
    %43 = vector.broadcast %42 : vector<2x1x32xf32> to vector<2x2x32xf32>
    %44 = vector.extract_strided_slice %4 {offsets = [0, 13, 0], sizes = [2, 1, 32], strides = [1, 1, 1]} : vector<2x16x32xf32> to vector<2x1x32xf32>
    %45 = vector.shape_cast %44 : vector<2x1x32xf32> to vector<2x1x32xf32>
    %46 = vector.broadcast %45 : vector<2x1x32xf32> to vector<2x2x32xf32>
    %47 = vector.extract_strided_slice %4 {offsets = [0, 14, 0], sizes = [2, 1, 32], strides = [1, 1, 1]} : vector<2x16x32xf32> to vector<2x1x32xf32>
    %48 = vector.shape_cast %47 : vector<2x1x32xf32> to vector<2x1x32xf32>
    %49 = vector.broadcast %48 : vector<2x1x32xf32> to vector<2x2x32xf32>
    %50 = vector.extract_strided_slice %4 {offsets = [0, 15, 0], sizes = [2, 1, 32], strides = [1, 1, 1]} : vector<2x16x32xf32> to vector<2x1x32xf32>
    %51 = vector.shape_cast %50 : vector<2x1x32xf32> to vector<2x1x32xf32>
    %52 = vector.broadcast %51 : vector<2x1x32xf32> to vector<2x2x32xf32>
    %53 = tpu.concatenate %7, %10, %13, %16, %19, %22, %25, %28, %31, %34, %37, %40, %43, %46, %49, %52 in 1 : vector<2x2x32xf32>, vector<2x2x32xf32>, vector<2x2x32xf32>, vector<2x2x32xf32>, vector<2x2x32xf32>, vector<2x2x32xf32>, vector<2x2x32xf32>, vector<2x2x32xf32>, vector<2x2x32xf32>, vector<2x2x32xf32>, vector<2x2x32xf32>, vector<2x2x32xf32>, vector<2x2x32xf32>, vector<2x2x32xf32>, vector<2x2x32xf32>, vector<2x2x32xf32> -> vector<2x32x32xf32>
    %c0_4 = arith.constant 0 : index
    %c0_5 = arith.constant 0 : index
    %c0_6 = arith.constant 0 : index
    %54 = vector.load %arg3[%c0_4, %c0_5, %c0_6] : memref<2x32x32xf32, #tpu.memory_space<vmem>>, vector<2x32x32xf32>
    tpu.vector_store %arg3[%c0_4, %c0_5, %c0_6], %53 {strides = array<i32>} : memref<2x32x32xf32, #tpu.memory_space<vmem>>, vector<2x32x32xf32>,
    return
  }
  func.func @transform_0(%arg0: i32) -> (i32, i32, i32) {
    %c0_i32 = arith.constant 0 : i32
    %c0_i32_0 = arith.constant 0 : i32
    %c0_i32_1 = arith.constant 0 : i32
    return %arg0, %c0_i32, %c0_i32_0 : i32, i32, i32
  }
  func.func @transform_1(%arg0: i32) -> (i32, i32) {
    %c0_i32 = arith.constant 0 : i32
    %c0_i32_0 = arith.constant 0 : i32
    %c0_i32_1 = arith.constant 0 : i32
    return %c0_i32, %c0_i32_0 : i32, i32
  }
  func.func @transform_2(%arg0: i32) -> (i32, i32, i32) {
    %c0_i32 = arith.constant 0 : i32
    %c0_i32_0 = arith.constant 0 : i32
    %c0_i32_1 = arith.constant 0 : i32
    return %arg0, %c0_i32, %c0_i32_0 : i32, i32, i32
  }
}

</mosaic_0001>

<llo_original>
// kernel: tpu_custom_call.1
$region0: #{tpu_custom_call.1}
  #allocation0 [shape = 'u32[]', space=smem, size = 0x4, offset = 0x4, fixed_abs, tag = 'smem constant byte address 0x4 - core index']
  #allocation1 [shape = 'u32[144,128]{1,0:T(1,128)}', space=vmem, size = 0x12000, scoped, tag = 'internal scratch']
  %s0 = inlined_call_operand.hbm [shape: f32[8,16,16], index: 0, kind: input, shape index: {}]
  %s1 = inlined_call_operand.hbm [shape: f32[16,32], index: 1, kind: input, shape index: {}]
  %s2 = inlined_call_operand.hbm [shape: f32[8,32,32], index: 2, kind: output, shape index: {}]
  %s3 = sld [smem:[#allocation0]]
  $region49: #{tpu_custom_call.1} parent=0
    _
  %s5 = ssub.s32 1, %s3
  %s6 = scalar_select 0, %s5, %s3
  $region1: #{tpu_custom_call.1} parent=0
    #allocation2 [shape = 'u8[32768]{0}', space=vmem, size = 0x8000, scoped, tag = 'input window, operand 0']
    #allocation3 [shape = 's32[2]{0}', space=sflag, size = 0x8, scoped, tag = 'scoped memory for tpu_custom_call.1']
    #allocation4 [shape = 's32[2]{0}', space=sflag, size = 0x8, scoped, tag = 'scoped memory for tpu_custom_call.1']
    #allocation5 [shape = 'u8[8192]{0}', space=vmem, size = 0x2000, scoped, tag = 'input window, operand 1, single buffered']
    #allocation6 [shape = 's32[1]{0}', space=sflag, size = 0x4, scoped, tag = 'scoped memory for tpu_custom_call.1']
    #allocation7 [shape = 'u8[65536]{0}', space=vmem, size = 0x10000, scoped, tag = 'output window, operand 0']
    %7 = vsyncpa [#allocation3], 0
    %s8 = scalar_lea.sflag [#allocation3], 1
    %9 = vsyncpa %s8, 0
    %10 = vsyncpa [#allocation6], 0
    %11 = vsyncpa [#allocation4], 0
    %s12 = scalar_lea.sflag [#allocation4], 1
    %13 = vsyncpa %s12, 0
    loop: start=0, step=1, limit=6
    $region2: #{tpu_custom_call.1} parent=1 // loop_pre_header
      _
    $region3: #{tpu_custom_call.1} parent=1 // loop_header
      %s15 = sphi 0, %s19
      %p16 = scmp.ge.s32.totalorder %s15, 6
      %s25 = sphi 0, %s27
      %s28 = sphi 0, %s25
      %s29 = sphi 0, %s28
      %s45 = sphi 0, %s29
      %s49 = sphi 0, %s49
      %s51 = sphi 0, %s49
      %s52 = sphi 0, %s51
      %s66 = sphi 0, %s52
      %s72 = sphi 0, %s74
      %s75 = sphi 0, %s72
      %s76 = sphi 0, %s75
      %s92 = sphi 0, %s76
    $region4: #{tpu_custom_call.1} parent=1 // loop_header_branch
      %18 = sbr.rel (%p16) target = $region8
    $region5: #{tpu_custom_call.1} parent=1 // loop_body
      %s20 = ssub.s32 %s15, 1
      %s21 = ssub.s32 %s15, 2
      %s22 = sadd.s32 %s15, 1
      %s23 = ssub.s32 %s15, %s22
      %p24 = scmp.eq.s32.totalorder %s23, 0
      %s26 = sadd.s32 %s25, 1
      %s27 = scalar_select %p24, %s25, %s26
      %p30 = pneg %p24
      %p31 = scmp.eq.s32.totalorder %s15, 3
      %p32 = por %p30, %p31
      %p33 = scmp.ne.s32.totalorder %s25, %s28
      %p34 = scmp.eq.s32.totalorder %s15, 0
      %p35 = por %p33, %p34
      %p36 = scmp.ne.s32.totalorder %s25, %s28
      %p37 = scmp.eq.s32.totalorder %s20, 3
      %p38 = por %p36, %p37
      %p39 = scmp.ne.s32.totalorder %s28, %s29
      %p40 = scmp.eq.s32.totalorder %s20, 0
      %p41 = por %p39, %p40
      %p42 = scmp.ne.s32.totalorder %s28, %s29
      %p43 = scmp.eq.s32.totalorder %s21, 3
      %p44 = por %p42, %p43
      %p46 = scmp.ne.s32.totalorder %s29, %s45
      %p47 = scmp.eq.s32.totalorder %s21, 0
      %p48 = por %p46, %p47
      %s50 = sadd.s32 %s49, 1
      %p53 = scmp.eq.s32.totalorder %s15, 3
      %p54 = scmp.ne.s32.totalorder %s49, %s51
      %p55 = scmp.eq.s32.totalorder %s15, 0
      %p56 = por %p54, %p55
      %p57 = scmp.ne.s32.totalorder %s49, %s51
      %p58 = scmp.eq.s32.totalorder %s20, 3
      %p59 = por %p57, %p58
      %p60 = scmp.ne.s32.totalorder %s51, %s52
      %p61 = scmp.eq.s32.totalorder %s20, 0
      %p62 = por %p60, %p61
      %p63 = scmp.ne.s32.totalorder %s51, %s52
      %p64 = scmp.eq.s32.totalorder %s21, 3
      %p65 = por %p63, %p64
      %p67 = scmp.ne.s32.totalorder %s52, %s66
      %p68 = scmp.eq.s32.totalorder %s21, 0
      %p69 = por %p67, %p68
      %s70 = ssub.s32 %s15, %s22
      %p71 = scmp.eq.s32.totalorder %s70, 0
      %s73 = sadd.s32 %s72, 1
      %s74 = scalar_select %p71, %s72, %s73
      %p77 = pneg %p71
      %p78 = scmp.eq.s32.totalorder %s15, 3
      %p79 = por %p77, %p78
      %p80 = scmp.ne.s32.totalorder %s72, %s75
      %p81 = scmp.eq.s32.totalorder %s15, 0
      %p82 = por %p80, %p81
      %p83 = scmp.ne.s32.totalorder %s72, %s75
      %p84 = scmp.eq.s32.totalorder %s20, 3
      %p85 = por %p83, %p84
      %p86 = scmp.ne.s32.totalorder %s75, %s76
      %p87 = scmp.eq.s32.totalorder %s20, 0
      %p88 = por %p86, %p87
      %p89 = scmp.ne.s32.totalorder %s75, %s76
      %p90 = scmp.eq.s32.totalorder %s21, 3
      %p91 = por %p89, %p90
      %p93 = scmp.ne.s32.totalorder %s76, %s92
      %p94 = scmp.eq.s32.totalorder %s21, 0
      %p95 = por %p93, %p94
      %p96 = scmp.le.s32.totalorder 1, %s15
      %p97 = scmp.lt.s32.totalorder %s15, 5
      %p98 = pnand %p96, %p97
      %p99 = pneg %p98
      // Predicated region
      $region9: #{tpu_custom_call.1} parent=5 // pred_check
        _
      $region10: #{tpu_custom_call.1} parent=5 // pred_check_branch
        %101 = sbr.rel (%p98) target = $region12
      $region11: #{tpu_custom_call.1} parent=5 // pred_region
        %s102 = ssub.s32 %s15, 1
        // Predicated region
        $region13: #{tpu_custom_call.1} parent=11 // pred_check
          %p103 = pneg %p62
        $region14: #{tpu_custom_call.1} parent=11 // pred_check_branch
          %105 = sbr.rel (%p103) target = $region16
        $region15: #{tpu_custom_call.1} parent=11 // pred_region
          %s107 = ssub.s32 256, 256
          %108 = vsyncadd [#allocation6], %s107
          %s109 = sshll.u32 [#allocation5], 4
          %s110 = int_to_ptr.vmem [resolvable:$true] %s109
          %115 = dma.hbm_to_vmem [thread:$0]  %s1, 256, %s110, [#allocation6], 128, 128, 8
        $region16: #{tpu_custom_call.1} parent=11 // pred_fallthru
          _
      $region12: #{tpu_custom_call.1} parent=5 // pred_fallthru
        _
      %p116 = scmp.lt.s32.totalorder %s15, 4
      // Predicated region
      $region17: #{tpu_custom_call.1} parent=5 // pred_check
        %p117 = pneg %p116
      $region18: #{tpu_custom_call.1} parent=5 // pred_check_branch
        %119 = sbr.rel (%p117) target = $region20
      $region19: #{tpu_custom_call.1} parent=5 // pred_region
        // Predicated region
        $region21: #{tpu_custom_call.1} parent=19 // pred_check
          %p120 = pneg %p35
        $region22: #{tpu_custom_call.1} parent=19 // pred_check_branch
          %122 = sbr.rel (%p120) target = $region24
        $region23: #{tpu_custom_call.1} parent=19 // pred_region
          %s123 = sand.u32 %s25, 1
          %s124 = scalar_lea.sflag [#allocation3], %s123
          %s125 = sand.u32 %s25, 1
          %s126 = smul.addr %s125, 32
          %s127 = scalar_lea.vmem [#allocation2], %s126
          %s128 = smul.u32 2, %s15
          %s130 = ssub.s32 512, 512
          %131 = vsyncadd %s124, %s130
          %s132 = smul.addr %s128, 2
          %s133 = smul.addr %s132, 128
          %s134 = scalar_lea.hbm %s0, %s133
          %s135 = sshll.u32 %s127, 4
          %s136 = int_to_ptr.vmem [resolvable:$true] %s135
          %141 = dma.hbm_to_vmem [thread:$0]  %s134, 512, %s136, %s124, 128, 128, 8
        $region24: #{tpu_custom_call.1} parent=19 // pred_fallthru
          _
      $region20: #{tpu_custom_call.1} parent=5 // pred_fallthru
        _
      %p142 = scmp.le.s32.totalorder 1, %s15
      %p143 = scmp.lt.s32.totalorder %s15, 5
      %p144 = pnand %p142, %p143
      %p145 = pneg %p144
      // Predicated region
      $region25: #{tpu_custom_call.1} parent=5 // pred_check
        _
      $region26: #{tpu_custom_call.1} parent=5 // pred_check_branch
        %147 = sbr.rel (%p144) target = $region28
      $region27: #{tpu_custom_call.1} parent=5 // pred_region
        %s148 = ssub.s32 %s15, 1
        %s149 = sand.u32 %s28, 1
        %s150 = scalar_lea.sflag [#allocation3], %s149
        %s151 = sand.u32 %s28, 1
        %s152 = smul.addr %s151, 32
        %s153 = scalar_lea.vmem [#allocation2], %s152
        // Predicated region
        $region29: #{tpu_custom_call.1} parent=27 // pred_check
          %p154 = pneg %p41
        $region30: #{tpu_custom_call.1} parent=27 // pred_check_branch
          %156 = sbr.rel (%p154) target = $region32
        $region31: #{tpu_custom_call.1} parent=27 // pred_region
          %157 = dma.done %s150, 512
        $region32: #{tpu_custom_call.1} parent=27 // pred_fallthru
          _
        // Predicated region
        $region33: #{tpu_custom_call.1} parent=27 // pred_check
          %p158 = pneg %p62
        $region34: #{tpu_custom_call.1} parent=27 // pred_check_branch
          %160 = sbr.rel (%p158) target = $region36
        $region35: #{tpu_custom_call.1} parent=27 // pred_region
          %161 = dma.done [#allocation6], 256
        $region36: #{tpu_custom_call.1} parent=27 // pred_fallthru
          _
        %s162 = sand.u32 %s28, 1
        %s163 = scalar_lea.sflag [#allocation3], %s162
        %s164 = sand.u32 %s28, 1
        %s165 = smul.addr %s164, 32
        %s166 = scalar_lea.vmem [#allocation2], %s165
        %p167 = pneg %p41
        %p168 = pneg %p38
        %p169 = pneg %p62
        %p170 = pneg %p59
        %p171 = pneg %p88
        %p172 = pneg %p85
        %s173 = sand.u32 %s75, 1
        %s174 = scalar_lea.sflag [#allocation4], %s173
        %s175 = sand.u32 %s75, 1
        %s176 = smul.addr %s175, 64
        %s177 = scalar_lea.vmem [#allocation7], %s176
        %s178 = smul.u32 2, %s20
        %s179 = smul.u32 2, %s20
        %v180 = vld [vmem:[%s153] sm:$0xff]
        %v181 = vld [vmem:[%s153 + $0x8] sm:$0xff]
        %v182 = vld [vmem:[%s153 + $0x10] sm:$0xff]
        %v183 = vld [vmem:[%s153 + $0x18] sm:$0xff]
        %v184 = vld [vmem:[#allocation5] sm:$0xff]
        %v185 = vld [vmem:[#allocation5 + $0x8] sm:$0xff]
        %vm186 = vcmask 130048
        %v188 = vsel %vm186, %v180, 0
        %v191 = vsel %vm186, %v181, 0
        %v194 = vsel %vm186, %v182, 0
        %v197 = vsel %vm186, %v183, 0
        %199 = vmatprep.subr.mxu0 0.0
        %200 = vmatpush1.msra.mxu0 %v184
        %201 = vmatprep.subr.mxu0 0.0
        %202 = vmatpush1.msra.mxu0 %v185
        %203 = vmatprep.subr.mxu0 0.0
        %204 = vmatpush1.msra.mxu0 0.0
        %205 = vmatprep.subr.mxu0 0.0
        %206 = vmatpush1.msra.mxu0 0.0
        %207 = vmatprep.subr.mxu0 0.0
        %208 = vmatpush1.msra.mxu0 0.0
        %209 = vmatprep.subr.mxu0 0.0
        %210 = vmatpush1.msra.mxu0 0.0
        %211 = vmatprep.subr.mxu0 0.0
        %212 = vmatpush1.msra.mxu0 0.0
        %213 = vmatprep.subr.mxu0 0.0
        %214 = vmatpush1.msra.mxu0 0.0
        %215 = vmatprep.subr.mxu0 0.0
        %216 = vmatpush1.msra.mxu0 0.0
        %217 = vmatprep.subr.mxu0 0.0
        %218 = vmatpush1.msra.mxu0 0.0
        %219 = vmatprep.subr.mxu0 0.0
        %220 = vmatpush1.msra.mxu0 0.0
        %221 = vmatprep.subr.mxu0 0.0
        %222 = vmatpush1.msra.mxu0 0.0
        %223 = vmatprep.subr.mxu0 0.0
        %224 = vmatpush1.msra.mxu0 0.0
        %225 = vmatprep.subr.mxu0 0.0
        %226 = vmatpush1.msra.mxu0 0.0
        %227 = vmatprep.subr.mxu0 0.0
        %228 = vmatpush1.msra.mxu0 0.0
        %229 = vmatprep.subr.mxu0 0.0
        %230 = vmatpush1.msra.mxu0 0.0
        %231 = vmatprep.subr.mxu0 0.0
        %232 = vmatpush1.msra.mxu0 0.0
        %233 = vmatprep.subr.mxu0 0.0
        %234 = vmatpush1.msra.mxu0 0.0
        %235 = vmatprep.subr.mxu0 0.0
        %236 = vmatpush1.msra.mxu0 0.0
        %237 = vmatprep.subr.mxu0 0.0
        %238 = vmatpush1.msra.mxu0 0.0
        %239 = vmatprep.subr.mxu0 0.0
        %240 = vmatpush1.msra.mxu0 0.0
        %241 = vmatprep.subr.mxu0 0.0
        %242 = vmatpush1.msra.mxu0 0.0
        %243 = vmatprep.subr.mxu0 0.0
        %244 = vmatpush1.msra.mxu0 0.0
        %245 = vmatprep.subr.mxu0 0.0
        %246 = vmatpush1.msra.mxu0 0.0
        %247 = vmatprep.subr.mxu0 0.0
        %248 = vmatpush1.msra.mxu0 0.0
        %249 = vmatprep.subr.mxu0 0.0
        %250 = vmatpush1.msra.mxu0 0.0
        %251 = vmatprep.subr.mxu0 0.0
        %252 = vmatpush1.msra.mxu0 0.0
        %253 = vmatprep.subr.mxu0 0.0
        %254 = vmatpush1.msra.mxu0 0.0
        %255 = vmatprep.subr.mxu0 0.0
        %256 = vmatpush1.msra.mxu0 0.0
        %257 = vmatprep.subr.mxu0 0.0
        %258 = vmatpush1.msra.mxu0 0.0
        %259 = vmatprep.subr.mxu0 0.0
        %260 = vmatpush1.msra.mxu0 0.0
        %261 = vmatprep.subr.mxu0 0.0
        %262 = vmatpush1.msra.mxu0 0.0
        %263 = vmatprep.mubr.f32.mxu0 0.0
        %264 = vmatmul.mubr.f32.gmra.mrb[0].mxu0 %v188
        %v265 = vpop.f32.mrb[0].mxu0
        %v266 = vadd.f32 0.0, %v265
        %v267 = vpop.f32.mrb[0].mxu0
        %268 = vmatprep.mubr.f32.mxu0 0.0
        %269 = vmatmul.mubr.f32.gmra.mrb[0].mxu0 %v191
        %v270 = vpop.f32.mrb[0].mxu0
        %v271 = vadd.f32 0.0, %v270
        %v272 = vpop.f32.mrb[0].mxu0
        %273 = vmatprep.mubr.f32.mxu0 0.0
        %274 = vmatmul.mubr.f32.gmra.mrb[0].mxu0 %v194
        %v275 = vpop.f32.mrb[0].mxu0
        %v276 = vadd.f32 0.0, %v275
        %v277 = vpop.f32.mrb[0].mxu0
        %278 = vmatprep.mubr.f32.mxu0 0.0
        %279 = vmatmul.mubr.f32.gmra.mrb[0].mxu0 %v197
        %v280 = vpop.f32.mrb[0].mxu0
        %v281 = vadd.f32 0.0, %v280
        %v282 = vpop.f32.mrb[0].mxu0
        %283 = vdwg.mxu0
        %v284 = vlaneseq
        %v285 = vshrl.u32 %v284, 7
        %v286 = vsub.s32 0, %v285
        %v287 = vrot.slane %v266, %v286
        %v288 = vlaneseq
        %v289 = vshrl.u32 %v288, 7
        %v290 = vsub.s32 0, %v289
        %v291 = vrot.slane %v276, %v290
        %v292 = vlaneseq
        %v293 = vshrl.u32 %v292, 7
        %v294 = vsub.s32 1, %v293
        %v295 = vrot.slane %v266, %v294
        %v296 = vlaneseq
        %v297 = vshrl.u32 %v296, 7
        %v298 = vsub.s32 1, %v297
        %v299 = vrot.slane %v276, %v298
        %v300 = vlaneseq
        %v301 = vshrl.u32 %v300, 7
        %v302 = vsub.s32 2, %v301
        %v303 = vrot.slane %v266, %v302
        %v304 = vlaneseq
        %v305 = vshrl.u32 %v304, 7
        %v306 = vsub.s32 2, %v305
        %v307 = vrot.slane %v276, %v306
        %v308 = vlaneseq
        %v309 = vshrl.u32 %v308, 7
        %v310 = vsub.s32 3, %v309
        %v311 = vrot.slane %v266, %v310
        %v312 = vlaneseq
        %v313 = vshrl.u32 %v312, 7
        %v314 = vsub.s32 3, %v313
        %v315 = vrot.slane %v276, %v314
        %v316 = vlaneseq
        %v317 = vshrl.u32 %v316, 7
        %v318 = vsub.s32 4, %v317
        %v319 = vrot.slane %v266, %v318
        %v320 = vlaneseq
        %v321 = vshrl.u32 %v320, 7
        %v322 = vsub.s32 4, %v321
        %v323 = vrot.slane %v276, %v322
        %v324 = vlaneseq
        %v325 = vshrl.u32 %v324, 7
        %v326 = vsub.s32 5, %v325
        %v327 = vrot.slane %v266, %v326
        %v328 = vlaneseq
        %v329 = vshrl.u32 %v328, 7
        %v330 = vsub.s32 5, %v329
        %v331 = vrot.slane %v276, %v330
        %v332 = vlaneseq
        %v333 = vshrl.u32 %v332, 7
        %v334 = vsub.s32 6, %v333
        %v335 = vrot.slane %v266, %v334
        %v336 = vlaneseq
        %v337 = vshrl.u32 %v336, 7
        %v338 = vsub.s32 6, %v337
        %v339 = vrot.slane %v276, %v338
        %v340 = vlaneseq
        %v341 = vshrl.u32 %v340, 7
        %v342 = vsub.s32 7, %v341
        %v343 = vrot.slane %v266, %v342
        %v344 = vlaneseq
        %v345 = vshrl.u32 %v344, 7
        %v346 = vsub.s32 7, %v345
        %v347 = vrot.slane %v276, %v346
        %v348 = vlaneseq
        %v349 = vshrl.u32 %v348, 7
        %v350 = vsub.s32 0, %v349
        %v351 = vrot.slane %v271, %v350
        %v352 = vlaneseq
        %v353 = vshrl.u32 %v352, 7
        %v354 = vsub.s32 0, %v353
        %v355 = vrot.slane %v281, %v354
        %v356 = vlaneseq
        %v357 = vshrl.u32 %v356, 7
        %v358 = vsub.s32 1, %v357
        %v359 = vrot.slane %v271, %v358
        %v360 = vlaneseq
        %v361 = vshrl.u32 %v360, 7
        %v362 = vsub.s32 1, %v361
        %v363 = vrot.slane %v281, %v362
        %v364 = vlaneseq
        %v365 = vshrl.u32 %v364, 7
        %v366 = vsub.s32 2, %v365
        %v367 = vrot.slane %v271, %v366
        %v368 = vlaneseq
        %v369 = vshrl.u32 %v368, 7
        %v370 = vsub.s32 2, %v369
        %v371 = vrot.slane %v281, %v370
        %v372 = vlaneseq
        %v373 = vshrl.u32 %v372, 7
        %v374 = vsub.s32 3, %v373
        %v375 = vrot.slane %v271, %v374
        %v376 = vlaneseq
        %v377 = vshrl.u32 %v376, 7
        %v378 = vsub.s32 3, %v377
        %v379 = vrot.slane %v281, %v378
        %v380 = vlaneseq
        %v381 = vshrl.u32 %v380, 7
        %v382 = vsub.s32 4, %v381
        %v383 = vrot.slane %v271, %v382
        %v384 = vlaneseq
        %v385 = vshrl.u32 %v384, 7
        %v386 = vsub.s32 4, %v385
        %v387 = vrot.slane %v281, %v386
        %v388 = vlaneseq
        %v389 = vshrl.u32 %v388, 7
        %v390 = vsub.s32 5, %v389
        %v391 = vrot.slane %v271, %v390
        %v392 = vlaneseq
        %v393 = vshrl.u32 %v392, 7
        %v394 = vsub.s32 5, %v393
        %v395 = vrot.slane %v281, %v394
        %v396 = vlaneseq
        %v397 = vshrl.u32 %v396, 7
        %v398 = vsub.s32 6, %v397
        %v399 = vrot.slane %v271, %v398
        %v400 = vlaneseq
        %v401 = vshrl.u32 %v400, 7
        %v402 = vsub.s32 6, %v401
        %v403 = vrot.slane %v281, %v402
        %v404 = vlaneseq
        %v405 = vshrl.u32 %v404, 7
        %v406 = vsub.s32 7, %v405
        %v407 = vrot.slane %v271, %v406
        %v408 = vlaneseq
        %v409 = vshrl.u32 %v408, 7
        %v410 = vsub.s32 7, %v409
        %v411 = vrot.slane %v281, %v410
        %vm412 = vcmask 1041408
        %v413 = vsel %vm412, %v287, %v295
        %v414 = vsel %vm412, %v291, %v299
        %vm415 = vcmask 1043456
        %v416 = vsel %vm415, %v413, %v303
        %v417 = vsel %vm415, %v414, %v307
        %vm418 = vcmask 1045504
        %v419 = vsel %vm418, %v416, %v311
        %v420 = vsel %vm418, %v417, %v315
        %v421 = vsel %vm412, %v319, %v327
        %v422 = vsel %vm412, %v323, %v331
        %v423 = vsel %vm415, %v421, %v335
        %v424 = vsel %vm415, %v422, %v339
        %v425 = vsel %vm418, %v423, %v343
        %v426 = vsel %vm418, %v424, %v347
        %v427 = vsel %vm412, %v351, %v359
        %v428 = vsel %vm412, %v355, %v363
        %v429 = vsel %vm415, %v427, %v367
        %v430 = vsel %vm415, %v428, %v371
        %v431 = vsel %vm418, %v429, %v375
        %v432 = vsel %vm418, %v430, %v379
        %v433 = vsel %vm412, %v383, %v391
        %v434 = vsel %vm412, %v387, %v395
        %v435 = vsel %vm415, %v433, %v399
        %v436 = vsel %vm415, %v434, %v403
        %v437 = vsel %vm418, %v435, %v407
        %v438 = vsel %vm418, %v436, %v411
        %vm439 = vcmask 261120
        %440 = vst.msk [vmem:[%s177] sm:$0xff] %vm439, %v419
        %441 = vst.msk [vmem:[%s177 + $0x8] sm:$0xff] %vm439, %v425
        %442 = vst.msk [vmem:[%s177 + $0x10] sm:$0xff] %vm439, %v431
        %443 = vst.msk [vmem:[%s177 + $0x18] sm:$0xff] %vm439, %v437
        %444 = vst.msk [vmem:[%s177 + $0x20] sm:$0xff] %vm439, %v420
        %445 = vst.msk [vmem:[%s177 + $0x28] sm:$0xff] %vm439, %v426
        %446 = vst.msk [vmem:[%s177 + $0x30] sm:$0xff] %vm439, %v432
        %447 = vst.msk [vmem:[%s177 + $0x38] sm:$0xff] %vm439, %v438
        %s448 = sand.u32 %s75, 1
        %s449 = scalar_lea.sflag [#allocation4], %s448
        %s450 = sand.u32 %s75, 1
        %s451 = smul.addr %s450, 64
        %s452 = scalar_lea.vmem [#allocation7], %s451
        // Predicated region
        $region37: #{tpu_custom_call.1} parent=27 // pred_check
          %p453 = pneg %p85
        $region38: #{tpu_custom_call.1} parent=27 // pred_check_branch
          %455 = sbr.rel (%p453) target = $region40
        $region39: #{tpu_custom_call.1} parent=27 // pred_region
          %s456 = smul.u32 2, %s20
          %s458 = ssub.s32 1024, 1024
          %459 = vsyncadd %s449, %s458
          %s460 = smul.addr %s456, 4
          %s461 = smul.addr %s460, 128
          %s462 = scalar_lea.hbm %s2, %s461
          %s463 = sshll.u32 %s452, 4
          %s464 = int_to_ptr.vmem [resolvable:$true] %s463
          %469 = dma.vmem_to_hbm [thread:$0]  %s464, 1024, %s462, %s449, 128, 128, 8
        $region40: #{tpu_custom_call.1} parent=27 // pred_fallthru
          _
      $region28: #{tpu_custom_call.1} parent=5 // pred_fallthru
        _
      %p470 = scmp.le.s32.totalorder 2, %s15
      // Predicated region
      $region41: #{tpu_custom_call.1} parent=5 // pred_check
        %p471 = pneg %p470
      $region42: #{tpu_custom_call.1} parent=5 // pred_check_branch
        %473 = sbr.rel (%p471) target = $region44
      $region43: #{tpu_custom_call.1} parent=5 // pred_region
        %s474 = ssub.s32 %s15, 2
        // Predicated region
        $region45: #{tpu_custom_call.1} parent=43 // pred_check
          %p475 = pneg %p91
        $region46: #{tpu_custom_call.1} parent=43 // pred_check_branch
          %477 = sbr.rel (%p475) target = $region48
        $region47: #{tpu_custom_call.1} parent=43 // pred_region
          %s478 = sand.u32 %s76, 1
          %s479 = scalar_lea.sflag [#allocation4], %s478
          %s480 = sand.u32 %s76, 1
          %s481 = smul.addr %s480, 64
          %s482 = scalar_lea.vmem [#allocation7], %s481
          %483 = dma.done %s479, 1024
        $region48: #{tpu_custom_call.1} parent=43 // pred_fallthru
          _
      $region44: #{tpu_custom_call.1} parent=5 // pred_fallthru
        _
    $region6: #{tpu_custom_call.1} parent=1 // loop_footer
      %s19 = sadd.s32 1, %s15
    $region7: #{tpu_custom_call.1} parent=1 // loop_footer_branch
      %14 = sbr.rel target = $region3
    $region8: #{tpu_custom_call.1} parent=1 // loop_exit
      _
    %484 = vsyncpa [#allocation3], 1
    %s485 = scalar_lea.sflag [#allocation3], 1
    %486 = vsyncpa %s485, 1
    %487 = vsyncpa [#allocation6], 1
    %488 = vsyncpa [#allocation4], 1
    %s489 = scalar_lea.sflag [#allocation4], 1
    %490 = vsyncpa %s489, 1

</llo_original>
